<compile_context>
chip_gen: v7x
topology: tpu7x:2x2x1
jax: 0.10.0
libtpu: 0.0.40
codegen_flags: <defaults>
</compile_context>

<pallas_src>
import jax
import jax.numpy as jnp
from jax.experimental import pallas as pl
from jax.experimental.pallas import tpu as pltpu


# ----------------------------------------------------------------------------
# Kernels
# ----------------------------------------------------------------------------
def _se_kernel_folded(x_ref, w1_ref, b1_ref, w2t_ref, b2_ref,
                      pool_ref, expand_ref, o_ref):
    """Lane-dense variant: x block is (TB, C*L)."""
    x = x_ref[...].astype(jnp.float32)                                       # (TB, C*L)
    # Squeeze: per-channel mean via a tiny pooling matmul (stays lane-dense).
    y = jnp.dot(x, pool_ref[...], preferred_element_type=jnp.float32)        # (TB, C)
    # Excite: Linear(C->H) + ReLU + Linear(H->C) + Sigmoid, f32 accumulation.
    h = jax.lax.dot_general(y, w1_ref[...], (((1,), (1,)), ((), ())),
                            preferred_element_type=jnp.float32) + b1_ref[...]   # (TB, H)
    h = jnp.maximum(h, 0.0)
    s = jnp.dot(h, w2t_ref[...], preferred_element_type=jnp.float32) + b2_ref[...]  # (TB, C)
    s = jax.nn.sigmoid(s)
    # Scale: expand the per-channel gate back to (TB, C*L) and do a lane-dense
    # multiply + unmasked store.
    gate = jnp.dot(s, expand_ref[...], preferred_element_type=jnp.float32)   # (TB, C*L)
    o_ref[...] = (x * gate).astype(o_ref.dtype)


def _se_kernel_3d(x_ref, w1_ref, b1_ref, w2t_ref, b2_ref, o_ref):
    """General variant: x block is (TB, C, L), L already lane-friendly."""
    x = x_ref[...].astype(jnp.float32)                                       # (TB, C, L)
    y = jnp.mean(x, axis=-1)                                                 # (TB, C)
    h = jax.lax.dot_general(y, w1_ref[...], (((1,), (1,)), ((), ())),
                            preferred_element_type=jnp.float32) + b1_ref[...]   # (TB, H)
    h = jnp.maximum(h, 0.0)
    s = jnp.dot(h, w2t_ref[...], preferred_element_type=jnp.float32) + b2_ref[...]  # (TB, C)
    s = jax.nn.sigmoid(s)
    o_ref[...] = (x * s[:, :, None]).astype(o_ref.dtype)


# ----------------------------------------------------------------------------
# Wrapper
# ----------------------------------------------------------------------------
def _pick_batch_tile(batch, row_bytes, target_bytes=4 << 20):
    """Rows per block so each block is ~a few MiB and divides the batch."""
    if batch <= 8 or batch * row_bytes <= target_bytes:
        return batch
    tb = max(8, min(batch, (target_bytes // max(row_bytes, 1)) // 8 * 8))
    while tb > 8 and batch % tb != 0:
        tb -= 8
    return tb if batch % tb == 0 else batch


def se_block(x, w1, b1, w2, b2):
    """x: (B, C, L).  PyTorch Linear layout: w1 (H, C), b1 (H,), w2 (C, H), b2 (C,)."""
    B, C, L = x.shape
    H = w1.shape[0]

    w1f = jnp.asarray(w1, jnp.float32)                   # (H, C)  C on lane axis
    w2t = jnp.asarray(w2, jnp.float32).T                 # (H, C)  C on lane axis
    b1r = jnp.asarray(b1, jnp.float32).reshape(1, H)
    b2r = jnp.asarray(b2, jnp.float32).reshape(1, C)

    itemsize = jnp.dtype(x.dtype).itemsize
    row_bytes = C * L * itemsize
    TB = _pick_batch_tile(B, row_bytes)
    block_bytes = TB * row_bytes
    # in + out, double-buffered, plus resident weights and headroom; v7x-safe cap.
    vmem_limit = int(min(64 << 20, max(8 << 20, 4 * block_bytes + (4 << 20))))
    cparams = pltpu.CompilerParams(
        dimension_semantics=("parallel",),
        vmem_limit_bytes=vmem_limit,
    )
    weight_specs = [
        pl.BlockSpec((H, C), lambda b: (0, 0)),           # w1     (resident)
        pl.BlockSpec((1, H), lambda b: (0, 0)),           # b1     (resident)
        pl.BlockSpec((H, C), lambda b: (0, 0)),           # w2^T   (resident)
        pl.BlockSpec((1, C), lambda b: (0, 0)),           # b2     (resident)
    ]

    # Lane-dense path: fold (C, L) into one lane axis when L is narrower than a
    # vreg and the folded width is 128-aligned (keeps every store unmasked).
    fold = (L < 128) and ((C * L) % 128 == 0) and (C * C * L * 4 <= (2 << 20))
    if fold:
        CL = C * L
        eye = jnp.eye(C, dtype=jnp.float32)
        pool = jnp.repeat(eye, L, axis=0) / float(L)      # (C*L, C): mean over L
        expand = jnp.repeat(eye, L, axis=1)               # (C, C*L): gate broadcast
        x2 = x.reshape(B, CL)
        out2 = pl.pallas_call(
            _se_kernel_folded,
            out_shape=jax.ShapeDtypeStruct((B, CL), x.dtype),
            grid_spec=pltpu.PrefetchScalarGridSpec(
                num_scalar_prefetch=0,
                grid=(B // TB,),
                in_specs=[pl.BlockSpec((TB, CL), lambda b: (b, 0))] + weight_specs + [
                    pl.BlockSpec((CL, C), lambda b: (0, 0)),   # pool   (resident)
                    pl.BlockSpec((C, CL), lambda b: (0, 0)),   # expand (resident)
                ],
                out_specs=pl.BlockSpec((TB, CL), lambda b: (b, 0)),
            ),
            compiler_params=cparams,
        )(x2, w1f, b1r, w2t, b2r, pool, expand)
        return out2.reshape(B, C, L)

    # General path: L is the lane axis, whole (C, L) slab per block.
    # TODO(synk): for very large C*L (v7x, 64 MiB VMEM) tile L with a two-phase
    # accumulated mean instead of holding the full (C, L) slab per block.
    return pl.pallas_call(
        _se_kernel_3d,
        out_shape=jax.ShapeDtypeStruct((B, C, L), x.dtype),
        grid_spec=pltpu.PrefetchScalarGridSpec(
            num_scalar_prefetch=0,
            grid=(B // TB,),
            in_specs=[pl.BlockSpec((TB, C, L), lambda b: (b, 0, 0))] + weight_specs,
            out_specs=pl.BlockSpec((TB, C, L), lambda b: (b, 0, 0)),
        ),
        compiler_params=cparams,
    )(x, w1f, b1r, w2t, b2r)


# ----------------------------------------------------------------------------
# Pure-JAX reference (mirrors the PyTorch forward exactly)
# ----------------------------------------------------------------------------
def se_block_ref(x, w1, b1, w2, b2):
    y = jnp.mean(x, axis=-1)
    y = jnp.maximum(y @ w1.T + b1, 0.0)
    y = jax.nn.sigmoid(y @ w2.T + b2)
    return x * y[:, :, None]


def _make_inputs(key, B, C, L, H):
    kx, k1, k2, k3, k4 = jax.random.split(key, 5)
    x = jax.random.normal(kx, (B, C, L), dtype=jnp.float32)
    bound1 = 1.0 / float(C) ** 0.5
    bound2 = 1.0 / float(H) ** 0.5
    w1 = jax.random.uniform(k1, (H, C), jnp.float32, -bound1, bound1)
    b1 = jax.random.uniform(k2, (H,), jnp.float32, -bound1, bound1)
    w2 = jax.random.uniform(k3, (C, H), jnp.float32, -bound2, bound2)
    b2 = jax.random.uniform(k4, (C,), jnp.float32, -bound2, bound2)
    return x, w1, b1, w2, b2


if __name__ == "__main__":
    key = jax.random.PRNGKey(0)
    k_a, k_b = jax.random.split(key)

    # Config A: the module's shapes (channels=32, reduction=16 -> hidden=2).
    # L=16 < 128 exercises the lane-dense folded path.
    B, C, L, R = 2, 32, 16, 16
    xa, w1a, b1a, w2a, b2a = _make_inputs(k_a, B, C, L, C // R)
    out_a = jax.block_until_ready(se_block(xa, w1a, b1a, w2a, b2a))
    ref_a = se_block_ref(xa, w1a, b1a, w2a, b2a)
    assert out_a.shape == (B, C, L)
    assert jnp.allclose(out_a, ref_a, atol=1e-5, rtol=1e-5), "folded path mismatch"

    # Config B: longer signal (L >= 128) exercises the general lane-axis path.
    B2, C2, L2, R2 = 4, 8, 256, 4
    xb, w1b, b1b, w2b, b2b = _make_inputs(k_b, B2, C2, L2, C2 // R2)
    out_b = jax.block_until_ready(se_block(xb, w1b, b1b, w2b, b2b))
    ref_b = se_block_ref(xb, w1b, b1b, w2b, b2b)
    assert out_b.shape == (B2, C2, L2)
    assert jnp.allclose(out_b, ref_b, atol=1e-5, rtol=1e-5), "general path mismatch"

    print("KERNEL_OK")
</pallas_src>

<mosaic_0001>
module attributes {stable_mosaic.version = 11 : i64} {
  func.func @_se_kernel_folded(%arg0: i32, %arg1: memref<2x512xf32, #tpu.memory_space<vmem>>, %arg2: memref<2x32xf32, #tpu.memory_space<vmem>>, %arg3: memref<1x2xf32, #tpu.memory_space<vmem>>, %arg4: memref<2x32xf32, #tpu.memory_space<vmem>>, %arg5: memref<1x32xf32, #tpu.memory_space<vmem>>, %arg6: memref<512x32xf32, #tpu.memory_space<vmem>>, %arg7: memref<32x512xf32, #tpu.memory_space<vmem>>, %arg8: memref<2x512xf32, #tpu.memory_space<vmem>>) attributes {dimension_semantics = [#tpu.dimension_semantics<parallel>], iteration_bounds = array<i64: 1>, scalar_prefetch = 0 : i64, scratch_operands = 0 : i64, tpu.core_type = #tpu.core_type<tc>, window_params = [{transform_indices = @transform_0, window_bounds = array<i64: 2, 512>}, {pipeline_mode = #tpu.pipeline_mode<synchronous>, transform_indices = @transform_1, window_bounds = array<i64: 2, 32>}, {pipeline_mode = #tpu.pipeline_mode<synchronous>, transform_indices = @transform_2, window_bounds = array<i64: 1, 2>}, {pipeline_mode = #tpu.pipeline_mode<synchronous>, transform_indices = @transform_3, window_bounds = array<i64: 2, 32>}, {pipeline_mode = #tpu.pipeline_mode<synchronous>, transform_indices = @transform_4, window_bounds = array<i64: 1, 32>}, {pipeline_mode = #tpu.pipeline_mode<synchronous>, transform_indices = @transform_5, window_bounds = array<i64: 512, 32>}, {pipeline_mode = #tpu.pipeline_mode<synchronous>, transform_indices = @transform_6, window_bounds = array<i64: 32, 512>}, {transform_indices = @transform_7, window_bounds = array<i64: 2, 512>}]} {
    %c0 = arith.constant 0 : index
    %c0_0 = arith.constant 0 : index
    %0 = vector.load %arg1[%c0, %c0_0] : memref<2x512xf32, #tpu.memory_space<vmem>>, vector<2x512xf32>
    %c0_1 = arith.constant 0 : index
    %c0_2 = arith.constant 0 : index
    %1 = vector.load %arg6[%c0_1, %c0_2] : memref<512x32xf32, #tpu.memory_space<vmem>>, vector<512x32xf32>
    %cst = arith.constant dense<0.000000e+00> : vector<2x32xf32>
    %2 = tpu.matmul %0, %1, %cst {dimension_numbers = #tpu.dot_dimension_numbers<[1], [0], [0], [1], [0, 0, 1, 1], [], []>} : vector<2x512xf32>, vector<512x32xf32>, vector<2x32xf32> -> vector<2x32xf32>
    %c0_3 = arith.constant 0 : index
    %c0_4 = arith.constant 0 : index
    %3 = vector.load %arg2[%c0_3, %c0_4] : memref<2x32xf32, #tpu.memory_space<vmem>>, vector<2x32xf32>
    %cst_5 = arith.constant dense<0.000000e+00> : vector<2x2xf32>
    %4 = tpu.matmul %2, %3, %cst_5 {dimension_numbers = #tpu.dot_dimension_numbers<[1], [1], [0], [0], [0, 0, 1, 0], [], []>} : vector<2x32xf32>, vector<2x32xf32>, vector<2x2xf32> -> vector<2x2xf32>
    %c0_6 = arith.constant 0 : index
    %c0_7 = arith.constant 0 : index
    %5 = vector.load %arg3[%c0_6, %c0_7] : memref<1x2xf32, #tpu.memory_space<vmem>>, vector<1x2xf32>
    %6 = vector.broadcast %5 : vector<1x2xf32> to vector<2x2xf32>
    %7 = arith.addf %4, %6 : vector<2x2xf32>
    %cst_8 = arith.constant 0.000000e+00 : f32
    %8 = vector.broadcast %cst_8 : f32 to vector<2x2xf32>
    %9 = arith.maximumf %7, %8 : vector<2x2xf32>
    %c0_9 = arith.constant 0 : index
    %c0_10 = arith.constant 0 : index
    %10 = vector.load %arg4[%c0_9, %c0_10] : memref<2x32xf32, #tpu.memory_space<vmem>>, vector<2x32xf32>
    %cst_11 = arith.constant dense<0.000000e+00> : vector<2x32xf32>
    %11 = tpu.matmul %9, %10, %cst_11 {dimension_numbers = #tpu.dot_dimension_numbers<[1], [0], [0], [1], [0, 0, 1, 1], [], []>} : vector<2x2xf32>, vector<2x32xf32>, vector<2x32xf32> -> vector<2x32xf32>
    %c0_12 = arith.constant 0 : index
    %c0_13 = arith.constant 0 : index
    %12 = vector.load %arg5[%c0_12, %c0_13] : memref<1x32xf32, #tpu.memory_space<vmem>>, vector<1x32xf32>
    %13 = vector.broadcast %12 : vector<1x32xf32> to vector<2x32xf32>
    %14 = arith.addf %11, %13 : vector<2x32xf32>
    %15 = arith.negf %14 : vector<2x32xf32>
    %16 = math.exp %15 : vector<2x32xf32>
    %cst_14 = arith.constant 1.000000e+00 : f32
    %17 = vector.broadcast %cst_14 : f32 to vector<2x32xf32>
    %18 = arith.addf %17, %16 : vector<2x32xf32>
    %19 = arith.divf %17, %18 : vector<2x32xf32>
    %c0_15 = arith.constant 0 : index
    %c0_16 = arith.constant 0 : index
    %20 = vector.load %arg7[%c0_15, %c0_16] : memref<32x512xf32, #tpu.memory_space<vmem>>, vector<32x512xf32>
    %cst_17 = arith.constant dense<0.000000e+00> : vector<2x512xf32>
    %21 = tpu.matmul %19, %20, %cst_17 {dimension_numbers = #tpu.dot_dimension_numbers<[1], [0], [0], [1], [0, 0, 1, 1], [], []>} : vector<2x32xf32>, vector<32x512xf32>, vector<2x512xf32> -> vector<2x512xf32>
    %22 = arith.mulf %0, %21 : vector<2x512xf32>
    %c0_18 = arith.constant 0 : index
    %c0_19 = arith.constant 0 : index
    %23 = vector.load %arg8[%c0_18, %c0_19] : memref<2x512xf32, #tpu.memory_space<vmem>>, vector<2x512xf32>
    tpu.vector_store %arg8[%c0_18, %c0_19], %22 {strides = array<i32>} : memref<2x512xf32, #tpu.memory_space<vmem>>, vector<2x512xf32>,
    return
  }
  func.func @transform_0(%arg0: i32) -> (i32, i32) {
    %c0_i32 = arith.constant 0 : i32
    %c0_i32_0 = arith.constant 0 : i32
    return %arg0, %c0_i32 : i32, i32
  }
  func.func @transform_1(%arg0: i32) -> (i32, i32) {
    %c0_i32 = arith.constant 0 : i32
    %c0_i32_0 = arith.constant 0 : i32
    %c0_i32_1 = arith.constant 0 : i32
    return %c0_i32, %c0_i32_0 : i32, i32
  }
  func.func @transform_2(%arg0: i32) -> (i32, i32) {
    %c0_i32 = arith.constant 0 : i32
    %c0_i32_0 = arith.constant 0 : i32
    %c0_i32_1 = arith.constant 0 : i32
    return %c0_i32, %c0_i32_0 : i32, i32
  }
  func.func @transform_3(%arg0: i32) -> (i32, i32) {
    %c0_i32 = arith.constant 0 : i32
    %c0_i32_0 = arith.constant 0 : i32
    %c0_i32_1 = arith.constant 0 : i32
    return %c0_i32, %c0_i32_0 : i32, i32
  }
  func.func @transform_4(%arg0: i32) -> (i32, i32) {
    %c0_i32 = arith.constant 0 : i32
    %c0_i32_0 = arith.constant 0 : i32
    %c0_i32_1 = arith.constant 0 : i32
    return %c0_i32, %c0_i32_0 : i32, i32
  }
  func.func @transform_5(%arg0: i32) -> (i32, i32) {
    %c0_i32 = arith.constant 0 : i32
    %c0_i32_0 = arith.constant 0 : i32
    %c0_i32_1 = arith.constant 0 : i32
    return %c0_i32, %c0_i32_0 : i32, i32
  }
  func.func @transform_6(%arg0: i32) -> (i32, i32) {
    %c0_i32 = arith.constant 0 : i32
    %c0_i32_0 = arith.constant 0 : i32
    %c0_i32_1 = arith.constant 0 : i32
    return %c0_i32, %c0_i32_0 : i32, i32
  }
  func.func @transform_7(%arg0: i32) -> (i32, i32) {
    %c0_i32 = arith.constant 0 : i32
    %c0_i32_0 = arith.constant 0 : i32
    return %arg0, %c0_i32 : i32, i32
  }
}

</mosaic_0001>

<llo_original>
// kernel: tpu_custom_call.1
$region0: #{tpu_custom_call.1}
  #allocation0 [shape = 'u32[]', space=smem, size = 0x4, offset = 0x4, fixed_abs, tag = 'smem constant byte address 0x4 - core index']
  #allocation1 [shape = 'u32[144,128]{1,0:T(1,128)}', space=vmem, size = 0x12000, scoped, tag = 'internal scratch']
  %s0 = inlined_call_operand.vmem [shape: f32[2,512], index: 0, kind: input, shape index: {}]
  %s1 = inlined_call_operand.vmem [shape: f32[2,32], index: 1, kind: input, shape index: {}]
  %s2 = inlined_call_operand.vmem [shape: f32[1,2], index: 2, kind: input, shape index: {}]
  %s3 = inlined_call_operand.vmem [shape: f32[2,32], index: 3, kind: input, shape index: {}]
  %s4 = inlined_call_operand.vmem [shape: f32[1,32], index: 4, kind: input, shape index: {}]
  %s5 = inlined_call_operand.vmem [shape: f32[512,32], index: 5, kind: input, shape index: {}]
  %s6 = inlined_call_operand.vmem [shape: f32[32,512], index: 6, kind: input, shape index: {}]
  %s7 = inlined_call_operand.hbm [shape: f32[2,512], index: 7, kind: output, shape index: {}]
  %s8 = sld [smem:[#allocation0]]
  $region38: #{tpu_custom_call.1} parent=0
    _
  %s10 = ssub.s32 1, %s8
  %s11 = scalar_select 0, %s10, %s8
  $region1: #{tpu_custom_call.1} parent=0
    #allocation2 [shape = 'u8[4096]{0}', space=vmem, size = 0x1000, scoped, tag = 'output window, operand 0, single buffered']
    #allocation3 [shape = 's32[1]{0}', space=sflag, size = 0x4, scoped, tag = 'scoped memory for tpu_custom_call.1']
    %12 = vsyncpa [#allocation3], 0
    // Predicated region
    $region2: #{tpu_custom_call.1} parent=1 // pred_check
      _
    $region3: #{tpu_custom_call.1} parent=1 // pred_check_branch
      %14 = sbr.rel (0) target = $region5
    $region4: #{tpu_custom_call.1} parent=1 // pred_region
      _
    $region5: #{tpu_custom_call.1} parent=1 // pred_fallthru
      _
    // Predicated region
    $region6: #{tpu_custom_call.1} parent=1 // pred_check
      _
    $region7: #{tpu_custom_call.1} parent=1 // pred_check_branch
      %16 = sbr.rel (0) target = $region9
    $region8: #{tpu_custom_call.1} parent=1 // pred_region
      _
    $region9: #{tpu_custom_call.1} parent=1 // pred_fallthru
      _
    // Predicated region
    $region10: #{tpu_custom_call.1} parent=1 // pred_check
      _
    $region11: #{tpu_custom_call.1} parent=1 // pred_check_branch
      %18 = sbr.rel (0) target = $region13
    $region12: #{tpu_custom_call.1} parent=1 // pred_region
      _
    $region13: #{tpu_custom_call.1} parent=1 // pred_fallthru
      _
    // Predicated region
    $region14: #{tpu_custom_call.1} parent=1 // pred_check
      _
    $region15: #{tpu_custom_call.1} parent=1 // pred_check_branch
      %20 = sbr.rel (0) target = $region17
    $region16: #{tpu_custom_call.1} parent=1 // pred_region
      _
    $region17: #{tpu_custom_call.1} parent=1 // pred_fallthru
      _
    // Predicated region
    $region18: #{tpu_custom_call.1} parent=1 // pred_check
      _
    $region19: #{tpu_custom_call.1} parent=1 // pred_check_branch
      %22 = sbr.rel (0) target = $region21
    $region20: #{tpu_custom_call.1} parent=1 // pred_region
      _
    $region21: #{tpu_custom_call.1} parent=1 // pred_fallthru
      _
    // Predicated region
    $region22: #{tpu_custom_call.1} parent=1 // pred_check
      _
    $region23: #{tpu_custom_call.1} parent=1 // pred_check_branch
      %24 = sbr.rel (0) target = $region25
    $region24: #{tpu_custom_call.1} parent=1 // pred_region
      _
    $region25: #{tpu_custom_call.1} parent=1 // pred_fallthru
      _
    // Predicated region
    $region26: #{tpu_custom_call.1} parent=1 // pred_check
      _
    $region27: #{tpu_custom_call.1} parent=1 // pred_check_branch
      %26 = sbr.rel (0) target = $region29
    $region28: #{tpu_custom_call.1} parent=1 // pred_region
      _
    $region29: #{tpu_custom_call.1} parent=1 // pred_fallthru
      _
    %v27 = vld [vmem:[%s0] sm:$0xff]
    %v28 = vld [vmem:[%s5] sm:$0xff]
    %v29 = vld [vmem:[%s5 + $0x8] sm:$0xff]
    %v30 = vld [vmem:[%s5 + $0x10] sm:$0xff]
    %v31 = vld [vmem:[%s5 + $0x18] sm:$0xff]
    %v32 = vld [vmem:[%s5 + $0x20] sm:$0xff]
    %v33 = vld [vmem:[%s5 + $0x28] sm:$0xff]
    %v34 = vld [vmem:[%s5 + $0x30] sm:$0xff]
    %v35 = vld [vmem:[%s5 + $0x38] sm:$0xff]
    %v36 = vld [vmem:[%s5 + $0x40] sm:$0xff]
    %v37 = vld [vmem:[%s5 + $0x48] sm:$0xff]
    %v38 = vld [vmem:[%s5 + $0x50] sm:$0xff]
    %v39 = vld [vmem:[%s5 + $0x58] sm:$0xff]
    %v40 = vld [vmem:[%s5 + $0x60] sm:$0xff]
    %v41 = vld [vmem:[%s5 + $0x68] sm:$0xff]
    %v42 = vld [vmem:[%s5 + $0x70] sm:$0xff]
    %v43 = vld [vmem:[%s5 + $0x78] sm:$0xff]
    %v44 = vld [vmem:[%s5 + $0x80] sm:$0xff]
    %v45 = vld [vmem:[%s5 + $0x88] sm:$0xff]
    %v46 = vld [vmem:[%s5 + $0x90] sm:$0xff]
    %v47 = vld [vmem:[%s5 + $0x98] sm:$0xff]
    %v48 = vld [vmem:[%s5 + $0xa0] sm:$0xff]
    %v49 = vld [vmem:[%s5 + $0xa8] sm:$0xff]
    %v50 = vld [vmem:[%s5 + $0xb0] sm:$0xff]
    %v51 = vld [vmem:[%s5 + $0xb8] sm:$0xff]
    %v52 = vld [vmem:[%s5 + $0xc0] sm:$0xff]
    %v53 = vld [vmem:[%s5 + $0xc8] sm:$0xff]
    %v54 = vld [vmem:[%s5 + $0xd0] sm:$0xff]
    %v55 = vld [vmem:[%s5 + $0xd8] sm:$0xff]
    %v56 = vld [vmem:[%s5 + $0xe0] sm:$0xff]
    %v57 = vld [vmem:[%s5 + $0xe8] sm:$0xff]
    %v58 = vld [vmem:[%s5 + $0xf0] sm:$0xff]
    %v59 = vld [vmem:[%s5 + $0xf8] sm:$0xff]
    %v60 = vld [vmem:[%s5 + $0x100] sm:$0xff]
    %v61 = vld [vmem:[%s5 + $0x108] sm:$0xff]
    %v62 = vld [vmem:[%s5 + $0x110] sm:$0xff]
    %v63 = vld [vmem:[%s5 + $0x118] sm:$0xff]
    %v64 = vld [vmem:[%s5 + $0x120] sm:$0xff]
    %v65 = vld [vmem:[%s5 + $0x128] sm:$0xff]
    %v66 = vld [vmem:[%s5 + $0x130] sm:$0xff]
    %v67 = vld [vmem:[%s5 + $0x138] sm:$0xff]
    %v68 = vld [vmem:[%s5 + $0x140] sm:$0xff]
    %v69 = vld [vmem:[%s5 + $0x148] sm:$0xff]
    %v70 = vld [vmem:[%s5 + $0x150] sm:$0xff]
    %v71 = vld [vmem:[%s5 + $0x158] sm:$0xff]
    %v72 = vld [vmem:[%s5 + $0x160] sm:$0xff]
    %v73 = vld [vmem:[%s5 + $0x168] sm:$0xff]
    %v74 = vld [vmem:[%s5 + $0x170] sm:$0xff]
    %v75 = vld [vmem:[%s5 + $0x178] sm:$0xff]
    %v76 = vld [vmem:[%s5 + $0x180] sm:$0xff]
    %v77 = vld [vmem:[%s5 + $0x188] sm:$0xff]
    %v78 = vld [vmem:[%s5 + $0x190] sm:$0xff]
    %v79 = vld [vmem:[%s5 + $0x198] sm:$0xff]
    %v80 = vld [vmem:[%s5 + $0x1a0] sm:$0xff]
    %v81 = vld [vmem:[%s5 + $0x1a8] sm:$0xff]
    %v82 = vld [vmem:[%s5 + $0x1b0] sm:$0xff]
    %v83 = vld [vmem:[%s5 + $0x1b8] sm:$0xff]
    %v84 = vld [vmem:[%s5 + $0x1c0] sm:$0xff]
    %v85 = vld [vmem:[%s5 + $0x1c8] sm:$0xff]
    %v86 = vld [vmem:[%s5 + $0x1d0] sm:$0xff]
    %v87 = vld [vmem:[%s5 + $0x1d8] sm:$0xff]
    %v88 = vld [vmem:[%s5 + $0x1e0] sm:$0xff]
    %v89 = vld [vmem:[%s5 + $0x1e8] sm:$0xff]
    %v90 = vld [vmem:[%s5 + $0x1f0] sm:$0xff]
    %v91 = vld [vmem:[%s5 + $0x1f8] sm:$0xff]
    %v93 = vcombine.high %v27, %v27
    %v95 = vunpack.c.l.s4 1983009808
    %v96 = vunpack.c.0.s8 %v95
    %v97 = vlaneseq
    %v98 = vshrl.u32 %v97, 7
    %v99 = vsub.s32 %v96, %v98
    %v100 = vrot.slane %v27, %v99
    %v102 = vunpack.c.l.s4 1983009808
    %v103 = vunpack.c.0.s8 %v102
    %v104 = vlaneseq
    %v105 = vshrl.u32 %v104, 7
    %v106 = vsub.s32 %v103, %v105
    %v107 = vrot.slane %v93, %v106
    %v108 = vcombine.high %v100, %v100
    %v109 = vcombine.high %v107, %v107
    %114 = vmatprep.subr.mxu0 0.0
    %115 = vmatpush1.msra.mxu0 %v28
    %116 = vmatprep.subr.mxu0 0.0
    %117 = vmatpush1.msra.mxu0 %v29
    %118 = vmatprep.subr.mxu0 0.0
    %119 = vmatpush1.msra.mxu0 %v30
    %120 = vmatprep.subr.mxu0 0.0
    %121 = vmatpush1.msra.mxu0 %v31
    %122 = vmatprep.subr.mxu0 0.0
    %123 = vmatpush1.msra.mxu0 %v32
    %124 = vmatprep.subr.mxu0 0.0
    %125 = vmatpush1.msra.mxu0 %v33
    %126 = vmatprep.subr.mxu0 0.0
    %127 = vmatpush1.msra.mxu0 %v34
    %128 = vmatprep.subr.mxu0 0.0
    %129 = vmatpush1.msra.mxu0 %v35
    %130 = vmatprep.subr.mxu0 0.0
    %131 = vmatpush1.msra.mxu0 %v36
    %132 = vmatprep.subr.mxu0 0.0
    %133 = vmatpush1.msra.mxu0 %v37
    %134 = vmatprep.subr.mxu0 0.0
    %135 = vmatpush1.msra.mxu0 %v38
    %136 = vmatprep.subr.mxu0 0.0
    %137 = vmatpush1.msra.mxu0 %v39
    %138 = vmatprep.subr.mxu0 0.0
    %139 = vmatpush1.msra.mxu0 %v40
    %140 = vmatprep.subr.mxu0 0.0
    %141 = vmatpush1.msra.mxu0 %v41
    %142 = vmatprep.subr.mxu0 0.0
    %143 = vmatpush1.msra.mxu0 %v42
    %144 = vmatprep.subr.mxu0 0.0
    %145 = vmatpush1.msra.mxu0 %v43
    %146 = vmatprep.subr.mxu0 0.0
    %147 = vmatpush1.msra.mxu0 %v44
    %148 = vmatprep.subr.mxu0 0.0
    %149 = vmatpush1.msra.mxu0 %v45
    %150 = vmatprep.subr.mxu0 0.0
    %151 = vmatpush1.msra.mxu0 %v46
    %152 = vmatprep.subr.mxu0 0.0
    %153 = vmatpush1.msra.mxu0 %v47
    %154 = vmatprep.subr.mxu0 0.0
    %155 = vmatpush1.msra.mxu0 %v48
    %156 = vmatprep.subr.mxu0 0.0
    %157 = vmatpush1.msra.mxu0 %v49
    %158 = vmatprep.subr.mxu0 0.0
    %159 = vmatpush1.msra.mxu0 %v50
    %160 = vmatprep.subr.mxu0 0.0
    %161 = vmatpush1.msra.mxu0 %v51
    %162 = vmatprep.subr.mxu0 0.0
    %163 = vmatpush1.msra.mxu0 %v52
    %164 = vmatprep.subr.mxu0 0.0
    %165 = vmatpush1.msra.mxu0 %v53
    %166 = vmatprep.subr.mxu0 0.0
    %167 = vmatpush1.msra.mxu0 %v54
    %168 = vmatprep.subr.mxu0 0.0
    %169 = vmatpush1.msra.mxu0 %v55
    %170 = vmatprep.subr.mxu0 0.0
    %171 = vmatpush1.msra.mxu0 %v56
    %172 = vmatprep.subr.mxu0 0.0
    %173 = vmatpush1.msra.mxu0 %v57
    %174 = vmatprep.subr.mxu0 0.0
    %175 = vmatpush1.msra.mxu0 %v58
    %176 = vmatprep.subr.mxu0 0.0
    %177 = vmatpush1.msra.mxu0 %v59
    %178 = vmatprep.mubr.f32.mxu0 %v108
    %179 = vmatmul.mubr.f32.gmra.mrb[0].mxu0 %v100
    %v180 = vpop.f32.mrb[0].mxu0
    %v181 = vadd.f32 0.0, %v180
    %v182 = vpop.f32.mrb[0].mxu0
    %183 = vdwg.mxu0
    %184 = vmatprep.subr.mxu0 0.0
    %185 = vmatpush1.msra.mxu0 %v60
    %186 = vmatprep.subr.mxu0 0.0
    %187 = vmatpush1.msra.mxu0 %v61
    %188 = vmatprep.subr.mxu0 0.0
    %189 = vmatpush1.msra.mxu0 %v62
    %190 = vmatprep.subr.mxu0 0.0
    %191 = vmatpush1.msra.mxu0 %v63
    %192 = vmatprep.subr.mxu0 0.0
    %193 = vmatpush1.msra.mxu0 %v64
    %194 = vmatprep.subr.mxu0 0.0
    %195 = vmatpush1.msra.mxu0 %v65
    %196 = vmatprep.subr.mxu0 0.0
    %197 = vmatpush1.msra.mxu0 %v66
    %198 = vmatprep.subr.mxu0 0.0
    %199 = vmatpush1.msra.mxu0 %v67
    %200 = vmatprep.subr.mxu0 0.0
    %201 = vmatpush1.msra.mxu0 %v68
    %202 = vmatprep.subr.mxu0 0.0
    %203 = vmatpush1.msra.mxu0 %v69
    %204 = vmatprep.subr.mxu0 0.0
    %205 = vmatpush1.msra.mxu0 %v70
    %206 = vmatprep.subr.mxu0 0.0
    %207 = vmatpush1.msra.mxu0 %v71
    %208 = vmatprep.subr.mxu0 0.0
    %209 = vmatpush1.msra.mxu0 %v72
    %210 = vmatprep.subr.mxu0 0.0
    %211 = vmatpush1.msra.mxu0 %v73
    %212 = vmatprep.subr.mxu0 0.0
    %213 = vmatpush1.msra.mxu0 %v74
    %214 = vmatprep.subr.mxu0 0.0
    %215 = vmatpush1.msra.mxu0 %v75
    %216 = vmatprep.subr.mxu0 0.0
    %217 = vmatpush1.msra.mxu0 %v76
    %218 = vmatprep.subr.mxu0 0.0
    %219 = vmatpush1.msra.mxu0 %v77
    %220 = vmatprep.subr.mxu0 0.0
    %221 = vmatpush1.msra.mxu0 %v78
    %222 = vmatprep.subr.mxu0 0.0
    %223 = vmatpush1.msra.mxu0 %v79
    %224 = vmatprep.subr.mxu0 0.0
    %225 = vmatpush1.msra.mxu0 %v80
    %226 = vmatprep.subr.mxu0 0.0
    %227 = vmatpush1.msra.mxu0 %v81
    %228 = vmatprep.subr.mxu0 0.0
    %229 = vmatpush1.msra.mxu0 %v82
    %230 = vmatprep.subr.mxu0 0.0
    %231 = vmatpush1.msra.mxu0 %v83
    %232 = vmatprep.subr.mxu0 0.0
    %233 = vmatpush1.msra.mxu0 %v84
    %234 = vmatprep.subr.mxu0 0.0
    %235 = vmatpush1.msra.mxu0 %v85
    %236 = vmatprep.subr.mxu0 0.0
    %237 = vmatpush1.msra.mxu0 %v86
    %238 = vmatprep.subr.mxu0 0.0
    %239 = vmatpush1.msra.mxu0 %v87
    %240 = vmatprep.subr.mxu0 0.0
    %241 = vmatpush1.msra.mxu0 %v88
    %242 = vmatprep.subr.mxu0 0.0
    %243 = vmatpush1.msra.mxu0 %v89
    %244 = vmatprep.subr.mxu0 0.0
    %245 = vmatpush1.msra.mxu0 %v90
    %246 = vmatprep.subr.mxu0 0.0
    %247 = vmatpush1.msra.mxu0 %v91
    %248 = vmatprep.mubr.f32.mxu0 %v109
    %249 = vmatmul.mubr.f32.gmra.mrb[0].mxu0 %v107
    %v250 = vpop.f32.mrb[0].mxu0
    %v251 = vadd.f32 %v181, %v250
    %v252 = vpop.f32.mrb[0].mxu0
    %253 = vdwg.mxu0
    %v254 = vld [vmem:[%s1] sm:$0x3]
    %v255 = vld [vmem:[%s2] sm:$0x1]
    %v257 = vlaneseq
    %v258 = vshrl.u32 %v257, 7
    %v259 = vsub.s32 0, %v258
    %v260 = vrot.slane %v255, %v259
    %vm262 = vcmask 261120
    %v264 = vsel %vm262, %v251, 0
    %v267 = vsel %vm262, %v254, 0
    %269 = vmatprep.subr.mxu0 0.0
    %270 = vmatpush1.xpose.msra.mxu0 %v267
    %271 = vmatprep.subr.mxu0 0.0
    %272 = vmatpush1.xpose.msra.mxu0 0.0
    %273 = vmatprep.subr.mxu0 0.0
    %274 = vmatpush1.xpose.msra.mxu0 0.0
    %275 = vmatprep.subr.mxu0 0.0
    %276 = vmatpush1.xpose.msra.mxu0 0.0
    %277 = vmatprep.subr.mxu0 0.0
    %278 = vmatpush1.xpose.msra.mxu0 0.0
    %279 = vmatprep.subr.mxu0 0.0
    %280 = vmatpush1.xpose.msra.mxu0 0.0
    %281 = vmatprep.subr.mxu0 0.0
    %282 = vmatpush1.xpose.msra.mxu0 0.0
    %283 = vmatprep.subr.mxu0 0.0
    %284 = vmatpush1.xpose.msra.mxu0 0.0
    %285 = vmatprep.subr.mxu0 0.0
    %286 = vmatpush1.xpose.msra.mxu0 0.0
    %287 = vmatprep.subr.mxu0 0.0
    %288 = vmatpush1.xpose.msra.mxu0 0.0
    %289 = vmatprep.subr.mxu0 0.0
    %290 = vmatpush1.xpose.msra.mxu0 0.0
    %291 = vmatprep.subr.mxu0 0.0
    %292 = vmatpush1.xpose.msra.mxu0 0.0
    %293 = vmatprep.subr.mxu0 0.0
    %294 = vmatpush1.xpose.msra.mxu0 0.0
    %295 = vmatprep.subr.mxu0 0.0
    %296 = vmatpush1.xpose.msra.mxu0 0.0
    %297 = vmatprep.subr.mxu0 0.0
    %298 = vmatpush1.xpose.msra.mxu0 0.0
    %299 = vmatprep.subr.mxu0 0.0
    %300 = vmatpush1.xpose.msra.mxu0 0.0
    %301 = vmatprep.subr.mxu0 0.0
    %302 = vmatpush1.xpose.msra.mxu0 0.0
    %303 = vmatprep.subr.mxu0 0.0
    %304 = vmatpush1.xpose.msra.mxu0 0.0
    %305 = vmatprep.subr.mxu0 0.0
    %306 = vmatpush1.xpose.msra.mxu0 0.0
    %307 = vmatprep.subr.mxu0 0.0
    %308 = vmatpush1.xpose.msra.mxu0 0.0
    %309 = vmatprep.subr.mxu0 0.0
    %310 = vmatpush1.xpose.msra.mxu0 0.0
    %311 = vmatprep.subr.mxu0 0.0
    %312 = vmatpush1.xpose.msra.mxu0 0.0
    %313 = vmatprep.subr.mxu0 0.0
    %314 = vmatpush1.xpose.msra.mxu0 0.0
    %315 = vmatprep.subr.mxu0 0.0
    %316 = vmatpush1.xpose.msra.mxu0 0.0
    %317 = vmatprep.subr.mxu0 0.0
    %318 = vmatpush1.xpose.msra.mxu0 0.0
    %319 = vmatprep.subr.mxu0 0.0
    %320 = vmatpush1.xpose.msra.mxu0 0.0
    %321 = vmatprep.subr.mxu0 0.0
    %322 = vmatpush1.xpose.msra.mxu0 0.0
    %323 = vmatprep.subr.mxu0 0.0
    %324 = vmatpush1.xpose.msra.mxu0 0.0
    %325 = vmatprep.subr.mxu0 0.0
    %326 = vmatpush1.xpose.msra.mxu0 0.0
    %327 = vmatprep.subr.mxu0 0.0
    %328 = vmatpush1.xpose.msra.mxu0 0.0
    %329 = vmatprep.subr.mxu0 0.0
    %330 = vmatpush1.xpose.msra.mxu0 0.0
    %331 = vmatprep.subr.mxu0 0.0
    %332 = vmatpush1.xpose.msra.mxu0 0.0
    %333 = vmatprep.mubr.f32.mxu0 0.0
    %334 = vmatmul.mubr.f32.gmra.mrb[0].mxu0 %v264
    %v335 = vpop.f32.mrb[0].mxu0
    %v336 = vadd.f32 %v260, %v335
    %v337 = vpop.f32.mrb[0].mxu0
    %338 = vdwg.mxu0
    %v339 = vmax.f32 %v336, 0.0
    %v340 = vld [vmem:[%s3] sm:$0x3]
    %v341 = vld [vmem:[%s4] sm:$0x1]
    %v343 = vlaneseq
    %v344 = vshrl.u32 %v343, 7
    %v345 = vsub.s32 0, %v344
    %v346 = vrot.slane %v341, %v345
    %vm348 = vcmask 15360
    %v350 = vsel %vm348, %v339, 0
    %vm352 = vcmask 1041408
    %v354 = vsel %vm352, %v340, 0
    %356 = vmatprep.subr.mxu0 0.0
    %357 = vmatpush1.msra.mxu0 %v354
    %358 = vmatprep.subr.mxu0 0.0
    %359 = vmatpush1.msra.mxu0 0.0
    %360 = vmatprep.subr.mxu0 0.0
    %361 = vmatpush1.msra.mxu0 0.0
    %362 = vmatprep.subr.mxu0 0.0
    %363 = vmatpush1.msra.mxu0 0.0
    %364 = vmatprep.subr.mxu0 0.0
    %365 = vmatpush1.msra.mxu0 0.0
    %366 = vmatprep.subr.mxu0 0.0
    %367 = vmatpush1.msra.mxu0 0.0
    %368 = vmatprep.subr.mxu0 0.0
    %369 = vmatpush1.msra.mxu0 0.0
    %370 = vmatprep.subr.mxu0 0.0
    %371 = vmatpush1.msra.mxu0 0.0
    %372 = vmatprep.subr.mxu0 0.0
    %373 = vmatpush1.msra.mxu0 0.0
    %374 = vmatprep.subr.mxu0 0.0
    %375 = vmatpush1.msra.mxu0 0.0
    %376 = vmatprep.subr.mxu0 0.0
    %377 = vmatpush1.msra.mxu0 0.0
    %378 = vmatprep.subr.mxu0 0.0
    %379 = vmatpush1.msra.mxu0 0.0
    %380 = vmatprep.subr.mxu0 0.0
    %381 = vmatpush1.msra.mxu0 0.0
    %382 = vmatprep.subr.mxu0 0.0
    %383 = vmatpush1.msra.mxu0 0.0
    %384 = vmatprep.subr.mxu0 0.0
    %385 = vmatpush1.msra.mxu0 0.0
    %386 = vmatprep.subr.mxu0 0.0
    %387 = vmatpush1.msra.mxu0 0.0
    %388 = vmatprep.subr.mxu0 0.0
    %389 = vmatpush1.msra.mxu0 0.0
    %390 = vmatprep.subr.mxu0 0.0
    %391 = vmatpush1.msra.mxu0 0.0
    %392 = vmatprep.subr.mxu0 0.0
    %393 = vmatpush1.msra.mxu0 0.0
    %394 = vmatprep.subr.mxu0 0.0
    %395 = vmatpush1.msra.mxu0 0.0
    %396 = vmatprep.subr.mxu0 0.0
    %397 = vmatpush1.msra.mxu0 0.0
    %398 = vmatprep.subr.mxu0 0.0
    %399 = vmatpush1.msra.mxu0 0.0
    %400 = vmatprep.subr.mxu0 0.0
    %401 = vmatpush1.msra.mxu0 0.0
    %402 = vmatprep.subr.mxu0 0.0
    %403 = vmatpush1.msra.mxu0 0.0
    %404 = vmatprep.subr.mxu0 0.0
    %405 = vmatpush1.msra.mxu0 0.0
    %406 = vmatprep.subr.mxu0 0.0
    %407 = vmatpush1.msra.mxu0 0.0
    %408 = vmatprep.subr.mxu0 0.0
    %409 = vmatpush1.msra.mxu0 0.0
    %410 = vmatprep.subr.mxu0 0.0
    %411 = vmatpush1.msra.mxu0 0.0
    %412 = vmatprep.subr.mxu0 0.0
    %413 = vmatpush1.msra.mxu0 0.0
    %414 = vmatprep.subr.mxu0 0.0
    %415 = vmatpush1.msra.mxu0 0.0
    %416 = vmatprep.subr.mxu0 0.0
    %417 = vmatpush1.msra.mxu0 0.0
    %418 = vmatprep.subr.mxu0 0.0
    %419 = vmatpush1.msra.mxu0 0.0
    %420 = vmatprep.mubr.f32.mxu0 0.0
    %421 = vmatmul.mubr.f32.gmra.mrb[0].mxu0 %v350
    %v422 = vpop.f32.mrb[0].mxu0
    %v423 = vadd.f32 %v346, %v422
    %v424 = vpop.f32.mrb[0].mxu0
    %425 = vdwg.mxu0
    %v426 = vxor.u32 %v423, 2147483648
    %v427 = vmul.f32 %v426, 1.442695
    %v428 = vpow.pop %v427
    %v429 = vadd.f32 %v428, 1.0
    %v430 = vrcp.pop %v429
    %v431 = vmul.f32 1.0, %v430
    %v432 = vld [vmem:[%s6] sm:$0xff]
    %v433 = vld [vmem:[%s6 + $0x8] sm:$0xff]
    %v434 = vld [vmem:[%s6 + $0x10] sm:$0xff]
    %v435 = vld [vmem:[%s6 + $0x18] sm:$0xff]
    %v436 = vld [vmem:[%s6 + $0x20] sm:$0xff]
    %v437 = vld [vmem:[%s6 + $0x28] sm:$0xff]
    %v438 = vld [vmem:[%s6 + $0x30] sm:$0xff]
    %v439 = vld [vmem:[%s6 + $0x38] sm:$0xff]
    %v440 = vld [vmem:[%s6 + $0x40] sm:$0xff]
    %v441 = vld [vmem:[%s6 + $0x48] sm:$0xff]
    %v442 = vld [vmem:[%s6 + $0x50] sm:$0xff]
    %v443 = vld [vmem:[%s6 + $0x58] sm:$0xff]
    %v444 = vld [vmem:[%s6 + $0x60] sm:$0xff]
    %v445 = vld [vmem:[%s6 + $0x68] sm:$0xff]
    %v446 = vld [vmem:[%s6 + $0x70] sm:$0xff]
    %v447 = vld [vmem:[%s6 + $0x78] sm:$0xff]
    %v449 = vsel %vm262, %v431, 0
    %451 = vmatprep.subr.mxu0 %v433
    %452 = vmatpush1.msra.mxu0 %v432
    %453 = vmatprep.subr.mxu0 %v437
    %454 = vmatpush1.msra.mxu0 %v436
    %455 = vmatprep.subr.mxu0 %v441
    %456 = vmatpush1.msra.mxu0 %v440
    %457 = vmatprep.subr.mxu0 %v445
    %458 = vmatpush1.msra.mxu0 %v444
    %459 = vmatprep.subr.mxu0 0.0
    %460 = vmatpush1.msra.mxu0 0.0
    %461 = vmatprep.subr.mxu0 0.0
    %462 = vmatpush1.msra.mxu0 0.0
    %463 = vmatprep.subr.mxu0 0.0
    %464 = vmatpush1.msra.mxu0 0.0
    %465 = vmatprep.subr.mxu0 0.0
    %466 = vmatpush1.msra.mxu0 0.0
    %467 = vmatprep.subr.mxu0 0.0
    %468 = vmatpush1.msra.mxu0 0.0
    %469 = vmatprep.subr.mxu0 0.0
    %470 = vmatpush1.msra.mxu0 0.0
    %471 = vmatprep.subr.mxu0 0.0
    %472 = vmatpush1.msra.mxu0 0.0
    %473 = vmatprep.subr.mxu0 0.0
    %474 = vmatpush1.msra.mxu0 0.0
    %475 = vmatprep.subr.mxu0 0.0
    %476 = vmatpush1.msra.mxu0 0.0
    %477 = vmatprep.subr.mxu0 0.0
    %478 = vmatpush1.msra.mxu0 0.0
    %479 = vmatprep.subr.mxu0 0.0
    %480 = vmatpush1.msra.mxu0 0.0
    %481 = vmatprep.subr.mxu0 0.0
    %482 = vmatpush1.msra.mxu0 0.0
    %483 = vmatprep.subr.mxu0 0.0
    %484 = vmatpush1.msra.mxu0 0.0
    %485 = vmatprep.subr.mxu0 0.0
    %486 = vmatpush1.msra.mxu0 0.0
    %487 = vmatprep.subr.mxu0 0.0
    %488 = vmatpush1.msra.mxu0 0.0
    %489 = vmatprep.subr.mxu0 0.0
    %490 = vmatpush1.msra.mxu0 0.0
    %491 = vmatprep.subr.mxu0 0.0
    %492 = vmatpush1.msra.mxu0 0.0
    %493 = vmatprep.subr.mxu0 0.0
    %494 = vmatpush1.msra.mxu0 0.0
    %495 = vmatprep.subr.mxu0 0.0
    %496 = vmatpush1.msra.mxu0 0.0
    %497 = vmatprep.subr.mxu0 0.0
    %498 = vmatpush1.msra.mxu0 0.0
    %499 = vmatprep.subr.mxu0 0.0
    %500 = vmatpush1.msra.mxu0 0.0
    %501 = vmatprep.subr.mxu0 0.0
    %502 = vmatpush1.msra.mxu0 0.0
    %503 = vmatprep.subr.mxu0 0.0
    %504 = vmatpush1.msra.mxu0 0.0
    %505 = vmatprep.subr.mxu0 0.0
    %506 = vmatpush1.msra.mxu0 0.0
    %507 = vmatprep.subr.mxu0 0.0
    %508 = vmatpush1.msra.mxu0 0.0
    %509 = vmatprep.subr.mxu0 0.0
    %510 = vmatpush1.msra.mxu0 0.0
    %511 = vmatprep.subr.mxu0 0.0
    %512 = vmatpush1.msra.mxu0 0.0
    %513 = vmatprep.subr.mxu0 0.0
    %514 = vmatpush1.msra.mxu0 0.0
    %515 = vmatprep.mubr.f32.mxu0 0.0
    %516 = vmatmul.mubr.f32.gmra.mrb[0].mxu0 %v449
    %v517 = vpop.f32.mrb[0].mxu0
    %v518 = vadd.f32 0.0, %v517
    %v519 = vpop.f32.mrb[0].mxu0
    %v520 = vadd.f32 0.0, %v519
    %521 = vdwg.mxu0
    %522 = vmatprep.subr.mxu0 %v435
    %523 = vmatpush1.msra.mxu0 %v434
    %524 = vmatprep.subr.mxu0 %v439
    %525 = vmatpush1.msra.mxu0 %v438
    %526 = vmatprep.subr.mxu0 %v443
    %527 = vmatpush1.msra.mxu0 %v442
    %528 = vmatprep.subr.mxu0 %v447
    %529 = vmatpush1.msra.mxu0 %v446
    %530 = vmatprep.subr.mxu0 0.0
    %531 = vmatpush1.msra.mxu0 0.0
    %532 = vmatprep.subr.mxu0 0.0
    %533 = vmatpush1.msra.mxu0 0.0
    %534 = vmatprep.subr.mxu0 0.0
    %535 = vmatpush1.msra.mxu0 0.0
    %536 = vmatprep.subr.mxu0 0.0
    %537 = vmatpush1.msra.mxu0 0.0
    %538 = vmatprep.subr.mxu0 0.0
    %539 = vmatpush1.msra.mxu0 0.0
    %540 = vmatprep.subr.mxu0 0.0
    %541 = vmatpush1.msra.mxu0 0.0
    %542 = vmatprep.subr.mxu0 0.0
    %543 = vmatpush1.msra.mxu0 0.0
    %544 = vmatprep.subr.mxu0 0.0
    %545 = vmatpush1.msra.mxu0 0.0
    %546 = vmatprep.subr.mxu0 0.0
    %547 = vmatpush1.msra.mxu0 0.0
    %548 = vmatprep.subr.mxu0 0.0
    %549 = vmatpush1.msra.mxu0 0.0
    %550 = vmatprep.subr.mxu0 0.0
    %551 = vmatpush1.msra.mxu0 0.0
    %552 = vmatprep.subr.mxu0 0.0
    %553 = vmatpush1.msra.mxu0 0.0
    %554 = vmatprep.subr.mxu0 0.0
    %555 = vmatpush1.msra.mxu0 0.0
    %556 = vmatprep.subr.mxu0 0.0
    %557 = vmatpush1.msra.mxu0 0.0
    %558 = vmatprep.subr.mxu0 0.0
    %559 = vmatpush1.msra.mxu0 0.0
    %560 = vmatprep.subr.mxu0 0.0
    %561 = vmatpush1.msra.mxu0 0.0
    %562 = vmatprep.subr.mxu0 0.0
    %563 = vmatpush1.msra.mxu0 0.0
    %564 = vmatprep.subr.mxu0 0.0
    %565 = vmatpush1.msra.mxu0 0.0
    %566 = vmatprep.subr.mxu0 0.0
    %567 = vmatpush1.msra.mxu0 0.0
    %568 = vmatprep.subr.mxu0 0.0
    %569 = vmatpush1.msra.mxu0 0.0
    %570 = vmatprep.subr.mxu0 0.0
    %571 = vmatpush1.msra.mxu0 0.0
    %572 = vmatprep.subr.mxu0 0.0
    %573 = vmatpush1.msra.mxu0 0.0
    %574 = vmatprep.subr.mxu0 0.0
    %575 = vmatpush1.msra.mxu0 0.0
    %576 = vmatprep.subr.mxu0 0.0
    %577 = vmatpush1.msra.mxu0 0.0
    %578 = vmatprep.subr.mxu0 0.0
    %579 = vmatpush1.msra.mxu0 0.0
    %580 = vmatprep.subr.mxu0 0.0
    %581 = vmatpush1.msra.mxu0 0.0
    %582 = vmatprep.subr.mxu0 0.0
    %583 = vmatpush1.msra.mxu0 0.0
    %584 = vmatprep.subr.mxu0 0.0
    %585 = vmatpush1.msra.mxu0 0.0
    %586 = vmatprep.mubr.f32.mxu0 0.0
    %587 = vmatmul.mubr.f32.gmra.mrb[0].mxu0 %v449
    %v588 = vpop.f32.mrb[0].mxu0
    %v589 = vadd.f32 0.0, %v588
    %v590 = vpop.f32.mrb[0].mxu0
    %v591 = vadd.f32 0.0, %v590
    %592 = vdwg.mxu0
    %v597 = vcombine.low %v518, %v520
    %v598 = vcombine.low %v589, %v591
    %v600 = vunpack.c.l.s4 1983009808
    %v601 = vunpack.c.0.s8 %v600
    %v602 = vlaneseq
    %v603 = vshrl.u32 %v602, 7
    %v604 = vsub.s32 %v601, %v603
    %v605 = vrot.slane %v597, %v604
    %v607 = vunpack.c.l.s4 1983009808
    %v608 = vunpack.c.0.s8 %v607
    %v609 = vlaneseq
    %v610 = vshrl.u32 %v609, 7
    %v611 = vsub.s32 %v608, %v610
    %v612 = vrot.slane %v598, %v611
    %v613 = vcombine.low %v605, %v612
    %v615 = vmul.f32 %v27, %v613
    %616 = vst [vmem:[#allocation2] sm:$0xff] %v615
    // Predicated region
    $region30: #{tpu_custom_call.1} parent=1 // pred_check
      _
    $region31: #{tpu_custom_call.1} parent=1 // pred_check_branch
      %618 = sbr.rel (0) target = $region33
    $region32: #{tpu_custom_call.1} parent=1 // pred_region
      %s620 = ssub.s32 128, 128
      %621 = vsyncadd [#allocation3], %s620
      %s623 = sshll.u32 [#allocation2], 4
      %s624 = int_to_ptr.vmem [resolvable:$true] %s623
      %626 = dma.vmem_to_hbm [thread:$0]  %s624, 128, %s7, [#allocation3]
    $region33: #{tpu_custom_call.1} parent=1 // pred_fallthru
      _
    // Predicated region
    $region34: #{tpu_custom_call.1} parent=1 // pred_check
      _
    $region35: #{tpu_custom_call.1} parent=1 // pred_check_branch
      %628 = sbr.rel (0) target = $region37
    $region36: #{tpu_custom_call.1} parent=1 // pred_region
      %629 = dma.done [#allocation3], 128
    $region37: #{tpu_custom_call.1} parent=1 // pred_fallthru
      _
    %630 = vsyncpa [#allocation3], 1

</llo_original>
